<compile_context>
chip_gen: v7x
topology: tpu7x:2x2x1
jax: 0.10.0
libtpu: 0.0.40
codegen_flags: <defaults>
</compile_context>

<pallas_src>
import functools
import math

import jax
import jax.numpy as jnp
from jax import lax
from jax.experimental import pallas as pl
from jax.experimental.pallas import tpu as pltpu

_NEG = -1e30  # finite "-inf" so exp() underflows to 0 without NaNs


def _round_up(v, mult):
    return (v + mult - 1) // mult * mult


def _subcenter_arcmargin_kernel(x_ref, w_ref, lbl_ref,              # inputs
                                loss_ref, corr_ref,                 # outputs
                                m_ref, l_ref, t_ref, idx_ref,       # scratch
                                *, cos_m, sin_m, th, mm, s, easy_margin,
                                num_sub, tile_b, tile_c, num_classes):
    ci = pl.program_id(1)          # class tile (reduction axis of the softmax)
    bj = pl.program_id(2)          # batch tile within the current batch group
    n_ci = pl.num_programs(1)

    # --- per batch-tile init of the online-softmax state (first class tile) ---
    @pl.when(ci == 0)
    def _init():
        m_ref[bj] = jnp.full((tile_b, 1), _NEG, jnp.float32)
        l_ref[bj] = jnp.zeros((tile_b, 1), jnp.float32)
        t_ref[bj] = jnp.zeros((tile_b, 1), jnp.float32)
        idx_ref[bj] = jnp.zeros((tile_b, 1), jnp.int32)

    x_n = x_ref[...]                                  # (tb, D) bf16, pre-normalised
    dn = (((1,), (1,)), ((), ()))                     # contract last dims: x @ w.T

    # --- sub-center cosine: max over K sub-centers of this class tile (MXU) ---
    cos = lax.dot_general(x_n, w_ref[0], dimension_numbers=dn,
                          preferred_element_type=jnp.float32)
    for k in range(1, num_sub):
        cos = jnp.maximum(
            cos,
            lax.dot_general(x_n, w_ref[k], dimension_numbers=dn,
                            preferred_element_type=jnp.float32))

    # --- additive angular margin (f32 elementwise, VPU) ---
    sine = jnp.sqrt(jnp.maximum(1.0 - cos * cos, 0.0))
    phi_m = cos * cos_m - sine * sin_m
    if easy_margin:
        phi = jnp.where(cos > 0.0, phi_m, cos)
    else:
        phi = jnp.where(cos - th > 0.0, phi_m, cos - mm)

    lbl = lbl_ref[...]                                            # (tb, 1) i32
    local_iota = lax.broadcasted_iota(jnp.int32, (tile_b, tile_c), 1)
    gcol = ci * tile_c + local_iota                               # global class id
    is_target = gcol == lbl
    logits = jnp.where(is_target, phi, cos) * s                   # select, no one-hot
    logits = jnp.where(gcol < num_classes, logits, _NEG)          # mask padded classes

    # --- online softmax / argmax merge across class tiles ---
    m_prev = m_ref[bj]
    tile_max = jnp.max(logits, axis=-1, keepdims=True)
    m_new = jnp.maximum(m_prev, tile_max)
    l_ref[bj] = (l_ref[bj] * jnp.exp(m_prev - m_new)
                 + jnp.sum(jnp.exp(logits - m_new), axis=-1, keepdims=True))
    m_ref[bj] = m_new
    t_ref[bj] = t_ref[bj] + jnp.sum(
        jnp.where(is_target, logits, 0.0), axis=-1, keepdims=True)

    # running argmax (first index wins on ties, class tiles visited in order)
    tile_arg = jnp.min(jnp.where(logits == tile_max, local_iota, tile_c),
                       axis=-1, keepdims=True) + ci * tile_c
    idx_ref[bj] = jnp.where(tile_max > m_prev, tile_arg, idx_ref[bj])

    # --- finalize: per-row CE loss and correctness flag ---
    @pl.when(ci == n_ci - 1)
    def _finalize():
        lse = jnp.log(l_ref[bj]) + m_ref[bj]
        loss_ref[...] = lse - t_ref[bj]
        corr_ref[...] = (idx_ref[bj] == lbl).astype(jnp.float32)


def subcenter_arcmargin_forward(x, weight, label, *, out_features, K=3,
                                s=30.0, m=0.5, easy_margin=False,
                                tb=None, tc=None, batch_groups=1):
    """Forward pass of SubcenterArcMarginProduct: returns (loss, prec1).

    batch_groups: leading "parallel" grid axis.  1 (default) reads the weight
    matrix from HBM exactly once; 2 lets v7x's two TensorCores split the batch
    at the cost of a second pass over the weights (use when compute-bound).
    """
    x = jnp.asarray(x, jnp.float32)
    weight = jnp.asarray(weight, jnp.float32)
    label = jnp.asarray(label).astype(jnp.int32)
    B, D = x.shape
    CK, D2 = weight.shape
    C = out_features
    assert D2 == D and CK == C * K and label.shape == (B,)

    # Row-normalise once in the wrapper (tiny compared to the B*C*K*D matmul)
    # and cast to bf16 so the kernel streams half the bytes and feeds the MXU.
    x_n = (x * lax.rsqrt(jnp.maximum(jnp.sum(x * x, -1, keepdims=True), 1e-24))
           ).astype(jnp.bfloat16)
    w_n = weight * lax.rsqrt(
        jnp.maximum(jnp.sum(weight * weight, -1, keepdims=True), 1e-24))
    # (C*K, D) -> (K, C, D): row c*K + k is sub-center k of class c.
    w_sub = jnp.transpose(w_n.reshape(C, K, D), (1, 0, 2)).astype(jnp.bfloat16)

    # Tile sizes: lane dims multiples of 128, sublane multiples of 16 (bf16).
    if tb is None:
        tb = min(256, _round_up(B, 16))
    if tc is None:
        tc = min(512, _round_up(C, 128))   # 512 keeps v7x (64 MiB VMEM) happy
    tb = _round_up(tb, 16)
    tc = _round_up(tc, 128)

    nb = -(-B // tb)                        # batch tiles before grouping
    nbo = max(1, min(int(batch_groups), nb))
    nbi = -(-nb // nbo)                     # batch tiles per group
    B_pad = nbo * nbi * tb
    C_pad = _round_up(C, tc)
    D_pad = _round_up(D, 128)
    ncls = C_pad // tc

    x_pad = jnp.zeros((B_pad, D_pad), jnp.bfloat16).at[:B, :D].set(x_n)
    w_pad = jnp.zeros((K, C_pad, D_pad), jnp.bfloat16).at[:, :C, :D].set(w_sub)
    lbl_pad = jnp.zeros((B_pad, 1), jnp.int32).at[:B, 0].set(label)

    kernel = functools.partial(
        _subcenter_arcmargin_kernel,
        cos_m=math.cos(m), sin_m=math.sin(m),
        th=math.cos(math.pi - m), mm=math.sin(math.pi - m) * m,
        s=float(s), easy_margin=bool(easy_margin),
        num_sub=K, tile_b=tb, tile_c=tc, num_classes=C)

    def b_map(bo, ci, bj):                  # batch-tile index map
        return (bo * nbi + bj, 0)

    flops = 2 * B_pad * C_pad * K * D_pad
    bytes_accessed = (ncls * B_pad * D_pad * 2      # x streamed once per class tile
                      + nbo * K * C_pad * D_pad * 2  # weights, once per batch group
                      + ncls * B_pad * 4             # labels
                      + 2 * B_pad * 4)               # outputs

    loss_rows, corr_rows = pl.pallas_call(
        kernel,
        grid=(nbo, ncls, nbi),
        in_specs=[
            pl.BlockSpec((tb, D_pad), b_map),                             # x (bf16)
            pl.BlockSpec((K, tc, D_pad), lambda bo, ci, bj: (0, ci, 0)),  # W tile
            pl.BlockSpec((tb, 1), b_map),                                 # labels
        ],
        out_specs=(
            pl.BlockSpec((tb, 1), b_map),            # per-row loss
            pl.BlockSpec((tb, 1), b_map),            # per-row correct flag
        ),
        out_shape=(
            jax.ShapeDtypeStruct((B_pad, 1), jnp.float32),
            jax.ShapeDtypeStruct((B_pad, 1), jnp.float32),
        ),
        scratch_shapes=[
            pltpu.VMEM((nbi, tb, 1), jnp.float32),   # running max  m
            pltpu.VMEM((nbi, tb, 1), jnp.float32),   # running sum-exp  l
            pltpu.VMEM((nbi, tb, 1), jnp.float32),   # target logit
            pltpu.VMEM((nbi, tb, 1), jnp.int32),     # running argmax
        ],
        compiler_params=pltpu.CompilerParams(
            dimension_semantics=("parallel", "arbitrary", "arbitrary"),
            vmem_limit_bytes=48 * 1024 * 1024),      # headroom inside v7x 64 MiB
        cost_estimate=pl.CostEstimate(
            flops=flops,
            transcendentals=B_pad * C_pad,
            bytes_accessed=bytes_accessed),
    )(x_pad, w_pad, lbl_pad)

    loss = jnp.sum(loss_rows[:B, 0]) / B
    prec1 = 100.0 * jnp.sum(corr_rows[:B, 0]) / B
    return loss, prec1


def _reference(x, weight, label, *, out_features, K, s, m, easy_margin):
    """Pure-JAX reference of the PyTorch forward (bf16 matmul to mirror kernel)."""
    cos_m, sin_m = math.cos(m), math.sin(m)
    th = math.cos(math.pi - m)
    mm = math.sin(math.pi - m) * m
    xn = (x * lax.rsqrt(jnp.maximum(jnp.sum(x * x, -1, keepdims=True), 1e-24))
          ).astype(jnp.bfloat16)
    wn = (weight * lax.rsqrt(
        jnp.maximum(jnp.sum(weight * weight, -1, keepdims=True), 1e-24))
          ).astype(jnp.bfloat16)
    cosine = lax.dot_general(xn, wn, (((1,), (1,)), ((), ())),
                             preferred_element_type=jnp.float32)      # (B, C*K)
    cosine = jnp.max(cosine.reshape(-1, out_features, K), axis=2)     # sub-center max
    sine = jnp.sqrt(jnp.clip(1.0 - cosine * cosine, 0.0, 1.0))
    phi_m = cosine * cos_m - sine * sin_m
    phi = (jnp.where(cosine > 0, phi_m, cosine) if easy_margin
           else jnp.where(cosine - th > 0, phi_m, cosine - mm))
    one_hot = jax.nn.one_hot(label, out_features, dtype=cosine.dtype)
    logits = (one_hot * phi + (1.0 - one_hot) * cosine) * s
    logp = jax.nn.log_softmax(logits, axis=-1)
    loss = -jnp.mean(jnp.take_along_axis(logp, label[:, None], axis=-1))
    prec1 = 100.0 * jnp.mean((jnp.argmax(logits, axis=-1) == label).astype(jnp.float32))
    return loss, prec1


if __name__ == "__main__":
    # Small but multi-tile shapes: with tb=16, tc=128 the grids are
    # (1, 2, 2) / (2, 2, 1); padded C (200 -> 256) and D (48 -> 128) exercise
    # the class-mask path; batch_groups=1 and 2 exercise both grid layouts.
    B, D, C, K = 32, 48, 200, 3
    key = jax.random.PRNGKey(0)
    kx, kw, kl = jax.random.split(key, 3)

    x = jax.random.normal(kx, (B, D), dtype=jnp.float32)
    bound = math.sqrt(6.0 / (D + C * K))          # xavier_uniform_ on (C*K, D)
    weight = jax.random.uniform(kw, (C * K, D), minval=-bound, maxval=bound,
                                dtype=jnp.float32)
    label = jax.random.randint(kl, (B,), 0, C, dtype=jnp.int32)

    ref_loss, ref_prec1 = _reference(x, weight, label, out_features=C, K=K,
                                     s=30.0, m=0.5, easy_margin=False)

    for bg in (1, 2):
        loss, prec1 = subcenter_arcmargin_forward(
            x, weight, label, out_features=C, K=K, s=30.0, m=0.5,
            easy_margin=False, tb=16, tc=128, batch_groups=bg)
        jax.block_until_ready((loss, prec1))
        assert jnp.allclose(loss, ref_loss, atol=2e-3, rtol=2e-3), (bg, loss, ref_loss)
        assert jnp.allclose(prec1, ref_prec1, atol=1e-3), (bg, prec1, ref_prec1)

    print("KERNEL_OK")
</pallas_src>

<mosaic_0001>
module attributes {stable_mosaic.version = 11 : i64} {
  func.func @_subcenter_arcmargin_kernel(%arg0: i32, %arg1: i32, %arg2: i32, %arg3: memref<16x128xbf16, #tpu.memory_space<vmem>>, %arg4: memref<3x128x128xbf16, #tpu.memory_space<vmem>>, %arg5: memref<16x1xi32, #tpu.memory_space<vmem>>, %arg6: memref<16x1xf32, #tpu.memory_space<vmem>>, %arg7: memref<16x1xf32, #tpu.memory_space<vmem>>, %arg8: memref<2x16x1xf32, #tpu.memory_space<vmem>>, %arg9: memref<2x16x1xf32, #tpu.memory_space<vmem>>, %arg10: memref<2x16x1xf32, #tpu.memory_space<vmem>>, %arg11: memref<2x16x1xi32, #tpu.memory_space<vmem>>) attributes {dimension_semantics = [#tpu.dimension_semantics<parallel>, #tpu.dimension_semantics<arbitrary>, #tpu.dimension_semantics<arbitrary>], iteration_bounds = array<i64: 1, 2, 2>, scalar_prefetch = 0 : i64, scratch_operands = 4 : i64, tpu.core_type = #tpu.core_type<tc>, window_params = [{transform_indices = @transform_0, window_bounds = array<i64: 16, 128>}, {transform_indices = @transform_1, window_bounds = array<i64: 3, 128, 128>}, {transform_indices = @transform_2, window_bounds = array<i64: 16, 1>}, {transform_indices = @transform_3, window_bounds = array<i64: 16, 1>}, {transform_indices = @transform_4, window_bounds = array<i64: 16, 1>}]} {
    %c0_i32 = arith.constant 0 : i32
    %0 = arith.cmpi eq, %arg1, %c0_i32 : i32
    %1 = arith.extui %0 : i1 to i32
    %c0_i32_0 = arith.constant 0 : i32
    %2 = arith.cmpi ne, %1, %c0_i32_0 : i32
    scf.if %2 {
      %cst_46 = arith.constant -1.000000e+30 : f32
      %106 = vector.broadcast %cst_46 : f32 to vector<16x1xf32>
      %107 = arith.index_cast %arg2 : i32 to index
      %c0_47 = arith.constant 0 : index
      %c0_48 = arith.constant 0 : index
      %108 = vector.load %arg8[%107, %c0_47, %c0_48] : memref<2x16x1xf32, #tpu.memory_space<vmem>>, vector<1x16x1xf32>
      %109 = vector.shape_cast %108 : vector<1x16x1xf32> to vector<16x1xf32>
      %110 = vector.shape_cast %106 : vector<16x1xf32> to vector<1x16x1xf32>
      tpu.vector_store %arg8[%107, %c0_47, %c0_48], %110 {strides = array<i32>} : memref<2x16x1xf32, #tpu.memory_space<vmem>>, vector<1x16x1xf32>,
      %cst_49 = arith.constant 0.000000e+00 : f32
      %111 = vector.broadcast %cst_49 : f32 to vector<16x1xf32>
      %112 = arith.index_cast %arg2 : i32 to index
      %c0_50 = arith.constant 0 : index
      %c0_51 = arith.constant 0 : index
      %113 = vector.load %arg9[%112, %c0_50, %c0_51] : memref<2x16x1xf32, #tpu.memory_space<vmem>>, vector<1x16x1xf32>
      %114 = vector.shape_cast %113 : vector<1x16x1xf32> to vector<16x1xf32>
      %115 = vector.shape_cast %111 : vector<16x1xf32> to vector<1x16x1xf32>
      tpu.vector_store %arg9[%112, %c0_50, %c0_51], %115 {strides = array<i32>} : memref<2x16x1xf32, #tpu.memory_space<vmem>>, vector<1x16x1xf32>,
      %cst_52 = arith.constant 0.000000e+00 : f32
      %116 = vector.broadcast %cst_52 : f32 to vector<16x1xf32>
      %117 = arith.index_cast %arg2 : i32 to index
      %c0_53 = arith.constant 0 : index
      %c0_54 = arith.constant 0 : index
      %118 = vector.load %arg10[%117, %c0_53, %c0_54] : memref<2x16x1xf32, #tpu.memory_space<vmem>>, vector<1x16x1xf32>
      %119 = vector.shape_cast %118 : vector<1x16x1xf32> to vector<16x1xf32>
      %120 = vector.shape_cast %116 : vector<16x1xf32> to vector<1x16x1xf32>
      tpu.vector_store %arg10[%117, %c0_53, %c0_54], %120 {strides = array<i32>} : memref<2x16x1xf32, #tpu.memory_space<vmem>>, vector<1x16x1xf32>,
      %c0_i32_55 = arith.constant 0 : i32
      %121 = vector.broadcast %c0_i32_55 : i32 to vector<16x1xi32>
      %122 = arith.index_cast %arg2 : i32 to index
      %c0_56 = arith.constant 0 : index
      %c0_57 = arith.constant 0 : index
      %123 = vector.load %arg11[%122, %c0_56, %c0_57] : memref<2x16x1xi32, #tpu.memory_space<vmem>>, vector<1x16x1xi32>
      %124 = vector.shape_cast %123 : vector<1x16x1xi32> to vector<16x1xi32>
      %125 = vector.shape_cast %121 : vector<16x1xi32> to vector<1x16x1xi32>
      tpu.vector_store %arg11[%122, %c0_56, %c0_57], %125 {strides = array<i32>} : memref<2x16x1xi32, #tpu.memory_space<vmem>>, vector<1x16x1xi32>,
    } else {
    }
    %c0 = arith.constant 0 : index
    %c0_1 = arith.constant 0 : index
    %3 = vector.load %arg3[%c0, %c0_1] : memref<16x128xbf16, #tpu.memory_space<vmem>>, vector<16x128xbf16>
    %c0_2 = arith.constant 0 : index
    %c0_3 = arith.constant 0 : index
    %c0_4 = arith.constant 0 : index
    %4 = vector.load %arg4[%c0_2, %c0_3, %c0_4] : memref<3x128x128xbf16, #tpu.memory_space<vmem>>, vector<1x128x128xbf16>
    %5 = vector.shape_cast %4 : vector<1x128x128xbf16> to vector<128x128xbf16>
    %cst = arith.constant dense<0.000000e+00> : vector<16x128xf32>
    %6 = tpu.matmul %3, %5, %cst {dimension_numbers = #tpu.dot_dimension_numbers<[1], [1], [0], [0], [0, 0, 1, 0], [], []>} : vector<16x128xbf16>, vector<128x128xbf16>, vector<16x128xf32> -> vector<16x128xf32>
    %c1 = arith.constant 1 : index
    %c0_5 = arith.constant 0 : index
    %c0_6 = arith.constant 0 : index
    %7 = vector.load %arg4[%c1, %c0_5, %c0_6] : memref<3x128x128xbf16, #tpu.memory_space<vmem>>, vector<1x128x128xbf16>
    %8 = vector.shape_cast %7 : vector<1x128x128xbf16> to vector<128x128xbf16>
    %cst_7 = arith.constant dense<0.000000e+00> : vector<16x128xf32>
    %9 = tpu.matmul %3, %8, %cst_7 {dimension_numbers = #tpu.dot_dimension_numbers<[1], [1], [0], [0], [0, 0, 1, 0], [], []>} : vector<16x128xbf16>, vector<128x128xbf16>, vector<16x128xf32> -> vector<16x128xf32>
    %10 = arith.maximumf %6, %9 : vector<16x128xf32>
    %c2 = arith.constant 2 : index
    %c0_8 = arith.constant 0 : index
    %c0_9 = arith.constant 0 : index
    %11 = vector.load %arg4[%c2, %c0_8, %c0_9] : memref<3x128x128xbf16, #tpu.memory_space<vmem>>, vector<1x128x128xbf16>
    %12 = vector.shape_cast %11 : vector<1x128x128xbf16> to vector<128x128xbf16>
    %cst_10 = arith.constant dense<0.000000e+00> : vector<16x128xf32>
    %13 = tpu.matmul %3, %12, %cst_10 {dimension_numbers = #tpu.dot_dimension_numbers<[1], [1], [0], [0], [0, 0, 1, 0], [], []>} : vector<16x128xbf16>, vector<128x128xbf16>, vector<16x128xf32> -> vector<16x128xf32>
    %14 = arith.maximumf %10, %13 : vector<16x128xf32>
    %15 = arith.mulf %14, %14 : vector<16x128xf32>
    %cst_11 = arith.constant 1.000000e+00 : f32
    %16 = vector.broadcast %cst_11 : f32 to vector<16x128xf32>
    %17 = arith.subf %16, %15 : vector<16x128xf32>
    %cst_12 = arith.constant 0.000000e+00 : f32
    %18 = vector.broadcast %cst_12 : f32 to vector<16x128xf32>
    %19 = arith.maximumf %17, %18 : vector<16x128xf32>
    %20 = math.sqrt %19 : vector<16x128xf32>
    %cst_13 = arith.constant 0.87758255 : f32
    %21 = vector.broadcast %cst_13 : f32 to vector<16x128xf32>
    %22 = arith.mulf %14, %21 : vector<16x128xf32>
    %cst_14 = arith.constant 0.47942555 : f32
    %23 = vector.broadcast %cst_14 : f32 to vector<16x128xf32>
    %24 = arith.mulf %20, %23 : vector<16x128xf32>
    %25 = arith.subf %22, %24 : vector<16x128xf32>
    %cst_15 = arith.constant -0.87758255 : f32
    %26 = vector.broadcast %cst_15 : f32 to vector<16x128xf32>
    %27 = arith.subf %14, %26 : vector<16x128xf32>
    %cst_16 = arith.constant 0.000000e+00 : f32
    %28 = vector.broadcast %cst_16 : f32 to vector<16x128xf32>
    %29 = arith.cmpf ogt, %27, %28 : vector<16x128xf32>
    %cst_17 = arith.constant 0.239712775 : f32
    %30 = vector.broadcast %cst_17 : f32 to vector<16x128xf32>
    %31 = arith.subf %14, %30 : vector<16x128xf32>
    %32 = arith.select %29, %25, %31 : vector<16x128xi1>, vector<16x128xf32>
    %c0_18 = arith.constant 0 : index
    %c0_19 = arith.constant 0 : index
    %33 = vector.load %arg5[%c0_18, %c0_19] : memref<16x1xi32, #tpu.memory_space<vmem>>, vector<16x1xi32>
    %34 = tpu.iota {dimensions = array<i32: 1>} : vector<16x128xi32>
    %c128_i32 = arith.constant 128 : i32
    %35 = arith.muli %arg1, %c128_i32 : i32
    %36 = vector.broadcast %35 : i32 to vector<16x128xi32>
    %37 = arith.addi %36, %34 : vector<16x128xi32>
    %38 = vector.broadcast %33 : vector<16x1xi32> to vector<16x128xi32>
    %39 = arith.cmpi eq, %37, %38 : vector<16x128xi32>
    %40 = arith.select %39, %32, %14 : vector<16x128xi1>, vector<16x128xf32>
    %cst_20 = arith.constant 3.000000e+01 : f32
    %41 = vector.broadcast %cst_20 : f32 to vector<16x128xf32>
    %42 = arith.mulf %40, %41 : vector<16x128xf32>
    %c200_i32 = arith.constant 200 : i32
    %43 = vector.broadcast %c200_i32 : i32 to vector<16x128xi32>
    %44 = arith.cmpi slt, %37, %43 : vector<16x128xi32>
    %cst_21 = arith.constant -1.000000e+30 : f32
    %45 = vector.broadcast %cst_21 : f32 to vector<16x128xf32>
    %46 = arith.select %44, %42, %45 : vector<16x128xi1>, vector<16x128xf32>
    %47 = arith.index_cast %arg2 : i32 to index
    %c0_22 = arith.constant 0 : index
    %c0_23 = arith.constant 0 : index
    %48 = vector.load %arg8[%47, %c0_22, %c0_23] : memref<2x16x1xf32, #tpu.memory_space<vmem>>, vector<1x16x1xf32>
    %49 = vector.shape_cast %48 : vector<1x16x1xf32> to vector<16x1xf32>
    %cst_24 = arith.constant dense<0xFF800000> : vector<16xf32>
    %50 = vector.multi_reduction <maximumf>, %46, %cst_24 [1] : vector<16x128xf32> to vector<16xf32>
    %51 = vector.shape_cast %50 : vector<16xf32> to vector<16x1xf32>
    %52 = arith.maximumf %49, %51 : vector<16x1xf32>
    %53 = arith.index_cast %arg2 : i32 to index
    %c0_25 = arith.constant 0 : index
    %c0_26 = arith.constant 0 : index
    %54 = vector.load %arg9[%53, %c0_25, %c0_26] : memref<2x16x1xf32, #tpu.memory_space<vmem>>, vector<1x16x1xf32>
    %55 = vector.shape_cast %54 : vector<1x16x1xf32> to vector<16x1xf32>
    %56 = arith.subf %49, %52 : vector<16x1xf32>
    %57 = math.exp %56 : vector<16x1xf32>
    %58 = arith.mulf %55, %57 : vector<16x1xf32>
    %59 = vector.broadcast %52 : vector<16x1xf32> to vector<16x128xf32>
    %60 = arith.subf %46, %59 : vector<16x128xf32>
    %61 = math.exp %60 : vector<16x128xf32>
    %cst_27 = arith.constant dense<0.000000e+00> : vector<16xf32>
    %62 = vector.multi_reduction <add>, %61, %cst_27 [1] : vector<16x128xf32> to vector<16xf32>
    %63 = vector.shape_cast %62 : vector<16xf32> to vector<16x1xf32>
    %64 = arith.addf %58, %63 : vector<16x1xf32>
    %65 = arith.index_cast %arg2 : i32 to index
    %c0_28 = arith.constant 0 : index
    %c0_29 = arith.constant 0 : index
    %66 = vector.load %arg9[%65, %c0_28, %c0_29] : memref<2x16x1xf32, #tpu.memory_space<vmem>>, vector<1x16x1xf32>
    %67 = vector.shape_cast %66 : vector<1x16x1xf32> to vector<16x1xf32>
    %68 = vector.shape_cast %64 : vector<16x1xf32> to vector<1x16x1xf32>
    tpu.vector_store %arg9[%65, %c0_28, %c0_29], %68 {strides = array<i32>} : memref<2x16x1xf32, #tpu.memory_space<vmem>>, vector<1x16x1xf32>,
    %69 = arith.index_cast %arg2 : i32 to index
    %c0_30 = arith.constant 0 : index
    %c0_31 = arith.constant 0 : index
    %70 = vector.load %arg8[%69, %c0_30, %c0_31] : memref<2x16x1xf32, #tpu.memory_space<vmem>>, vector<1x16x1xf32>
    %71 = vector.shape_cast %70 : vector<1x16x1xf32> to vector<16x1xf32>
    %72 = vector.shape_cast %52 : vector<16x1xf32> to vector<1x16x1xf32>
    tpu.vector_store %arg8[%69, %c0_30, %c0_31], %72 {strides = array<i32>} : memref<2x16x1xf32, #tpu.memory_space<vmem>>, vector<1x16x1xf32>,
    %73 = arith.index_cast %arg2 : i32 to index
    %c0_32 = arith.constant 0 : index
    %c0_33 = arith.constant 0 : index
    %74 = vector.load %arg10[%73, %c0_32, %c0_33] : memref<2x16x1xf32, #tpu.memory_space<vmem>>, vector<1x16x1xf32>
    %75 = vector.shape_cast %74 : vector<1x16x1xf32> to vector<16x1xf32>
    %cst_34 = arith.constant 0.000000e+00 : f32
    %76 = vector.broadcast %cst_34 : f32 to vector<16x128xf32>
    %77 = arith.select %39, %46, %76 : vector<16x128xi1>, vector<16x128xf32>
    %cst_35 = arith.constant dense<0.000000e+00> : vector<16xf32>
    %78 = vector.multi_reduction <add>, %77, %cst_35 [1] : vector<16x128xf32> to vector<16xf32>
    %79 = vector.shape_cast %78 : vector<16xf32> to vector<16x1xf32>
    %80 = arith.addf %75, %79 : vector<16x1xf32>
    %81 = arith.index_cast %arg2 : i32 to index
    %c0_36 = arith.constant 0 : index
    %c0_37 = arith.constant 0 : index
    %82 = vector.load %arg10[%81, %c0_36, %c0_37] : memref<2x16x1xf32, #tpu.memory_space<vmem>>, vector<1x16x1xf32>
    %83 = vector.shape_cast %82 : vector<1x16x1xf32> to vector<16x1xf32>
    %84 = vector.shape_cast %80 : vector<16x1xf32> to vector<1x16x1xf32>
    tpu.vector_store %arg10[%81, %c0_36, %c0_37], %84 {strides = array<i32>} : memref<2x16x1xf32, #tpu.memory_space<vmem>>, vector<1x16x1xf32>,
    %85 = vector.broadcast %51 : vector<16x1xf32> to vector<16x128xf32>
    %86 = arith.cmpf oeq, %46, %85 : vector<16x128xf32>
    %c128_i32_38 = arith.constant 128 : i32
    %87 = vector.broadcast %c128_i32_38 : i32 to vector<16x128xi32>
    %88 = arith.select %86, %34, %87 : vector<16x128xi1>, vector<16x128xi32>
    %cst_39 = arith.constant dense<2147483647> : vector<16xi32>
    %89 = vector.multi_reduction <minsi>, %88, %cst_39 [1] : vector<16x128xi32> to vector<16xi32>
    %90 = vector.shape_cast %89 : vector<16xi32> to vector<16x1xi32>
    %c128_i32_40 = arith.constant 128 : i32
    %91 = arith.muli %arg1, %c128_i32_40 : i32
    %92 = vector.broadcast %91 : i32 to vector<16x1xi32>
    %93 = arith.addi %90, %92 : vector<16x1xi32>
    %94 = arith.cmpf ogt, %51, %49 : vector<16x1xf32>
    %95 = arith.index_cast %arg2 : i32 to index
    %c0_41 = arith.constant 0 : index
    %c0_42 = arith.constant 0 : index
    %96 = vector.load %arg11[%95, %c0_41, %c0_42] : memref<2x16x1xi32, #tpu.memory_space<vmem>>, vector<1x16x1xi32>
    %97 = vector.shape_cast %96 : vector<1x16x1xi32> to vector<16x1xi32>
    %98 = arith.select %94, %93, %97 : vector<16x1xi1>, vector<16x1xi32>
    %99 = arith.index_cast %arg2 : i32 to index
    %c0_43 = arith.constant 0 : index
    %c0_44 = arith.constant 0 : index
    %100 = vector.load %arg11[%99, %c0_43, %c0_44] : memref<2x16x1xi32, #tpu.memory_space<vmem>>, vector<1x16x1xi32>
    %101 = vector.shape_cast %100 : vector<1x16x1xi32> to vector<16x1xi32>
    %102 = vector.shape_cast %98 : vector<16x1xi32> to vector<1x16x1xi32>
    tpu.vector_store %arg11[%99, %c0_43, %c0_44], %102 {strides = array<i32>} : memref<2x16x1xi32, #tpu.memory_space<vmem>>, vector<1x16x1xi32>,
    %c1_i32 = arith.constant 1 : i32
    %103 = arith.cmpi eq, %arg1, %c1_i32 : i32
    %104 = arith.extui %103 : i1 to i32
    %c0_i32_45 = arith.constant 0 : i32
    %105 = arith.cmpi ne, %104, %c0_i32_45 : i32
    scf.if %105 {
      %106 = arith.index_cast %arg2 : i32 to index
      %c0_46 = arith.constant 0 : index
      %c0_47 = arith.constant 0 : index
      %107 = vector.load %arg9[%106, %c0_46, %c0_47] : memref<2x16x1xf32, #tpu.memory_space<vmem>>, vector<1x16x1xf32>
      %108 = vector.shape_cast %107 : vector<1x16x1xf32> to vector<16x1xf32>
      %109 = math.log %108 : vector<16x1xf32>
      %110 = arith.index_cast %arg2 : i32 to index
      %c0_48 = arith.constant 0 : index
      %c0_49 = arith.constant 0 : index
      %111 = vector.load %arg8[%110, %c0_48, %c0_49] : memref<2x16x1xf32, #tpu.memory_space<vmem>>, vector<1x16x1xf32>
      %112 = vector.shape_cast %111 : vector<1x16x1xf32> to vector<16x1xf32>
      %113 = arith.addf %109, %112 : vector<16x1xf32>
      %114 = arith.index_cast %arg2 : i32 to index
      %c0_50 = arith.constant 0 : index
      %c0_51 = arith.constant 0 : index
      %115 = vector.load %arg10[%114, %c0_50, %c0_51] : memref<2x16x1xf32, #tpu.memory_space<vmem>>, vector<1x16x1xf32>
      %116 = vector.shape_cast %115 : vector<1x16x1xf32> to vector<16x1xf32>
      %117 = arith.subf %113, %116 : vector<16x1xf32>
      %c0_52 = arith.constant 0 : index
      %c0_53 = arith.constant 0 : index
      %118 = vector.load %arg6[%c0_52, %c0_53] : memref<16x1xf32, #tpu.memory_space<vmem>>, vector<16x1xf32>
      tpu.vector_store %arg6[%c0_52, %c0_53], %117 {strides = array<i32>} : memref<16x1xf32, #tpu.memory_space<vmem>>, vector<16x1xf32>,
      %119 = arith.index_cast %arg2 : i32 to index
      %c0_54 = arith.constant 0 : index
      %c0_55 = arith.constant 0 : index
      %120 = vector.load %arg11[%119, %c0_54, %c0_55] : memref<2x16x1xi32, #tpu.memory_space<vmem>>, vector<1x16x1xi32>
      %121 = vector.shape_cast %120 : vector<1x16x1xi32> to vector<16x1xi32>
      %122 = arith.cmpi eq, %121, %33 : vector<16x1xi32>
      %123 = arith.extui %122 : vector<16x1xi1> to vector<16x1xi32>
      %124 = arith.sitofp %123 : vector<16x1xi32> to vector<16x1xf32>
      %c0_56 = arith.constant 0 : index
      %c0_57 = arith.constant 0 : index
      %125 = vector.load %arg7[%c0_56, %c0_57] : memref<16x1xf32, #tpu.memory_space<vmem>>, vector<16x1xf32>
      tpu.vector_store %arg7[%c0_56, %c0_57], %124 {strides = array<i32>} : memref<16x1xf32, #tpu.memory_space<vmem>>, vector<16x1xf32>,
    } else {
    }
    return
  }
  func.func @transform_0(%arg0: i32, %arg1: i32, %arg2: i32) -> (i32, i32) {
    %c2_i32 = arith.constant 2 : i32
    %0 = arith.muli %arg0, %c2_i32 : i32
    %1 = arith.addi %0, %arg2 : i32
    %c0_i32 = arith.constant 0 : i32
    %c0_i32_0 = arith.constant 0 : i32
    return %1, %c0_i32 : i32, i32
  }
  func.func @transform_1(%arg0: i32, %arg1: i32, %arg2: i32) -> (i32, i32, i32) {
    %c0_i32 = arith.constant 0 : i32
    %c0_i32_0 = arith.constant 0 : i32
    %c0_i32_1 = arith.constant 0 : i32
    return %c0_i32, %arg1, %c0_i32_0 : i32, i32, i32
  }
  func.func @transform_2(%arg0: i32, %arg1: i32, %arg2: i32) -> (i32, i32) {
    %c2_i32 = arith.constant 2 : i32
    %0 = arith.muli %arg0, %c2_i32 : i32
    %1 = arith.addi %0, %arg2 : i32
    %c0_i32 = arith.constant 0 : i32
    %c0_i32_0 = arith.constant 0 : i32
    return %1, %c0_i32 : i32, i32
  }
  func.func @transform_3(%arg0: i32, %arg1: i32, %arg2: i32) -> (i32, i32) {
    %c2_i32 = arith.constant 2 : i32
    %0 = arith.muli %arg0, %c2_i32 : i32
    %1 = arith.addi %0, %arg2 : i32
    %c0_i32 = arith.constant 0 : i32
    %c0_i32_0 = arith.constant 0 : i32
    return %1, %c0_i32 : i32, i32
  }
  func.func @transform_4(%arg0: i32, %arg1: i32, %arg2: i32) -> (i32, i32) {
    %c2_i32 = arith.constant 2 : i32
    %0 = arith.muli %arg0, %c2_i32 : i32
    %1 = arith.addi %0, %arg2 : i32
    %c0_i32 = arith.constant 0 : i32
    %c0_i32_0 = arith.constant 0 : i32
    return %1, %c0_i32 : i32, i32
  }
}

</mosaic_0001>

<llo_original>
// kernel: tpu_custom_call.1
$region0: #{tpu_custom_call.1}
  #allocation0 [shape = 'u32[]', space=smem, size = 0x4, offset = 0x4, fixed_abs, tag = 'smem constant byte address 0x4 - core index']
  #allocation1 [shape = 'u32[144,128]{1,0:T(1,128)}', space=vmem, size = 0x12000, scoped, tag = 'internal scratch']
  #allocation2 [shape = 'f32[2,16,1]{2,1,0:T(8,128)}', space=vmem, size = 0x4000, scoped, tag = 'scratch operand']
  #allocation3 [shape = 'f32[2,16,1]{2,1,0:T(8,128)}', space=vmem, size = 0x4000, scoped, tag = 'scratch operand']
  #allocation4 [shape = 'f32[2,16,1]{2,1,0:T(8,128)}', space=vmem, size = 0x4000, scoped, tag = 'scratch operand']
  #allocation5 [shape = 's32[2,16,1]{2,1,0:T(8,128)}', space=vmem, size = 0x4000, scoped, tag = 'scratch operand']
  #allocation8 [shape = 's32[]', space=sflag, size = 0x4, offset = 0, fixed_abs, tag = 'sflag constant byte address 0x0 - dummy sync flag']
  %s0 = inlined_call_operand.vmem [shape: bf16[32,128], index: 0, kind: input, shape index: {}]
  %s1 = inlined_call_operand.hbm [shape: bf16[3,256,128], index: 1, kind: input, shape index: {}]
  %s2 = inlined_call_operand.vmem [shape: s32[32,1], index: 2, kind: input, shape index: {}]
  %s3 = inlined_call_operand.vmem [shape: f32[32,1], index: 3, kind: output, shape index: {0}]
  %s4 = inlined_call_operand.vmem [shape: f32[32,1], index: 4, kind: output, shape index: {1}]
  %5 = xla_tuple %s3, %s4
  %s6 = sld [smem:[#allocation0]]
  $region65: #{tpu_custom_call.1} parent=0
    _
  %s8 = ssub.s32 1, %s6
  %s9 = scalar_select 0, %s8, %s6
  $region1: #{tpu_custom_call.1} parent=0
    #allocation6 [shape = 'u8[196608]{0}', space=vmem, size = 0x30000, scoped, tag = 'input window, operand 1']
    #allocation7 [shape = 's32[2]{0}', space=sflag, size = 0x8, scoped, tag = 'scoped memory for tpu_custom_call.1']
    %10 = vsyncpa [#allocation7], 0
    %s11 = scalar_lea.sflag [#allocation7], 1
    %12 = vsyncpa %s11, 0
    loop: start=0, step=1, limit=6
    $region2: #{tpu_custom_call.1} parent=1 // loop_pre_header
      _
    $region3: #{tpu_custom_call.1} parent=1 // loop_header
      %s14 = sphi 0, %s18
      %p15 = scmp.ge.s32.totalorder %s14, 6
      %s21 = sphi 0, %s40
      %s22 = sphi 0, %s36
      %s23 = sphi 0, %s32
      %s24 = sphi 0, %s21
      %s25 = sphi 0, %s22
      %s26 = sphi 0, %s23
      %s27 = sphi 0, %s24
      %s28 = sphi 0, %s25
      %s29 = sphi 0, %s26
      %s47 = sphi 0, %s49
      %s50 = sphi 0, %s47
      %s51 = sphi 0, %s50
      %s67 = sphi 0, %s51
      %s73 = sphi 0, %s75
      %s76 = sphi 0, %s73
      %s77 = sphi 0, %s76
      %s93 = sphi 0, %s77
      %s103 = sphi 0, %s105
      %s106 = sphi 0, %s103
      %s107 = sphi 0, %s106
      %s123 = sphi 0, %s107
      %s133 = sphi 0, %s135
      %s136 = sphi 0, %s133
      %s137 = sphi 0, %s136
      %s153 = sphi 0, %s137
      %s163 = sphi 0, %s165
      %s166 = sphi 0, %s163
      %s167 = sphi 0, %s166
      %s183 = sphi 0, %s167
    $region4: #{tpu_custom_call.1} parent=1 // loop_header_branch
      %17 = sbr.rel (%p15) target = $region8
    $region5: #{tpu_custom_call.1} parent=1 // loop_body
      %s19 = ssub.s32 %s14, 1
      %s20 = ssub.s32 %s14, 2
      %s30 = sadd.s32 1, %s23
      %p31 = scmp.ge.s32.totalorder %s30, 2
      %s32 = scalar_select %p31, 0, %s30
      %s33 = sadd.s32 1, %s22
      %s34 = scalar_select %p31, %s33, %s22
      %p35 = scmp.ge.s32.totalorder %s34, 2
      %s36 = scalar_select %p35, 0, %s34
      %s37 = sadd.s32 1, %s21
      %s38 = scalar_select %p35, %s37, %s21
      %p39 = scmp.ge.s32.totalorder %s38, 1
      %s40 = scalar_select %p39, 0, %s38
      %s41 = smul.u32 %s21, 2
      %s42 = sadd.s32 %s41, %s23
      %s43 = smul.u32 %s40, 2
      %s44 = sadd.s32 %s43, %s32
      %s45 = ssub.s32 %s42, %s44
      %p46 = scmp.eq.s32.totalorder %s45, 0
      %s48 = sadd.s32 %s47, 1
      %s49 = scalar_select %p46, %s47, %s48
      %p52 = pneg %p46
      %p53 = scmp.eq.s32.totalorder %s14, 3
      %p54 = por %p52, %p53
      %p55 = scmp.ne.s32.totalorder %s47, %s50
      %p56 = scmp.eq.s32.totalorder %s14, 0
      %p57 = por %p55, %p56
      %p58 = scmp.ne.s32.totalorder %s47, %s50
      %p59 = scmp.eq.s32.totalorder %s19, 3
      %p60 = por %p58, %p59
      %p61 = scmp.ne.s32.totalorder %s50, %s51
      %p62 = scmp.eq.s32.totalorder %s19, 0
      %p63 = por %p61, %p62
      %p64 = scmp.ne.s32.totalorder %s50, %s51
      %p65 = scmp.eq.s32.totalorder %s20, 3
      %p66 = por %p64, %p65
      %p68 = scmp.ne.s32.totalorder %s51, %s67
      %p69 = scmp.eq.s32.totalorder %s20, 0
      %p70 = por %p68, %p69
      %s71 = ssub.s32 %s22, %s36
      %p72 = scmp.eq.s32.totalorder %s71, 0
      %s74 = sadd.s32 %s73, 1
      %s75 = scalar_select %p72, %s73, %s74
      %p78 = pneg %p72
      %p79 = scmp.eq.s32.totalorder %s14, 3
      %p80 = por %p78, %p79
      %p81 = scmp.ne.s32.totalorder %s73, %s76
      %p82 = scmp.eq.s32.totalorder %s14, 0
      %p83 = por %p81, %p82
      %p84 = scmp.ne.s32.totalorder %s73, %s76
      %p85 = scmp.eq.s32.totalorder %s19, 3
      %p86 = por %p84, %p85
      %p87 = scmp.ne.s32.totalorder %s76, %s77
      %p88 = scmp.eq.s32.totalorder %s19, 0
      %p89 = por %p87, %p88
      %p90 = scmp.ne.s32.totalorder %s76, %s77
      %p91 = scmp.eq.s32.totalorder %s20, 3
      %p92 = por %p90, %p91
      %p94 = scmp.ne.s32.totalorder %s77, %s93
      %p95 = scmp.eq.s32.totalorder %s20, 0
      %p96 = por %p94, %p95
      %s97 = smul.u32 %s21, 2
      %s98 = sadd.s32 %s97, %s23
      %s99 = smul.u32 %s40, 2
      %s100 = sadd.s32 %s99, %s32
      %s101 = ssub.s32 %s98, %s100
      %p102 = scmp.eq.s32.totalorder %s101, 0
      %s104 = sadd.s32 %s103, 1
      %s105 = scalar_select %p102, %s103, %s104
      %p108 = pneg %p102
      %p109 = scmp.eq.s32.totalorder %s14, 3
      %p110 = por %p108, %p109
      %p111 = scmp.ne.s32.totalorder %s103, %s106
      %p112 = scmp.eq.s32.totalorder %s14, 0
      %p113 = por %p111, %p112
      %p114 = scmp.ne.s32.totalorder %s103, %s106
      %p115 = scmp.eq.s32.totalorder %s19, 3
      %p116 = por %p114, %p115
      %p117 = scmp.ne.s32.totalorder %s106, %s107
      %p118 = scmp.eq.s32.totalorder %s19, 0
      %p119 = por %p117, %p118
      %p120 = scmp.ne.s32.totalorder %s106, %s107
      %p121 = scmp.eq.s32.totalorder %s20, 3
      %p122 = por %p120, %p121
      %p124 = scmp.ne.s32.totalorder %s107, %s123
      %p125 = scmp.eq.s32.totalorder %s20, 0
      %p126 = por %p124, %p125
      %s127 = smul.u32 %s21, 2
      %s128 = sadd.s32 %s127, %s23
      %s129 = smul.u32 %s40, 2
      %s130 = sadd.s32 %s129, %s32
      %s131 = ssub.s32 %s128, %s130
      %p132 = scmp.eq.s32.totalorder %s131, 0
      %s134 = sadd.s32 %s133, 1
      %s135 = scalar_select %p132, %s133, %s134
      %p138 = pneg %p132
      %p139 = scmp.eq.s32.totalorder %s14, 3
      %p140 = por %p138, %p139
      %p141 = scmp.ne.s32.totalorder %s133, %s136
      %p142 = scmp.eq.s32.totalorder %s14, 0
      %p143 = por %p141, %p142
      %p144 = scmp.ne.s32.totalorder %s133, %s136
      %p145 = scmp.eq.s32.totalorder %s19, 3
      %p146 = por %p144, %p145
      %p147 = scmp.ne.s32.totalorder %s136, %s137
      %p148 = scmp.eq.s32.totalorder %s19, 0
      %p149 = por %p147, %p148
      %p150 = scmp.ne.s32.totalorder %s136, %s137
      %p151 = scmp.eq.s32.totalorder %s20, 3
      %p152 = por %p150, %p151
      %p154 = scmp.ne.s32.totalorder %s137, %s153
      %p155 = scmp.eq.s32.totalorder %s20, 0
      %p156 = por %p154, %p155
      %s157 = smul.u32 %s21, 2
      %s158 = sadd.s32 %s157, %s23
      %s159 = smul.u32 %s40, 2
      %s160 = sadd.s32 %s159, %s32
      %s161 = ssub.s32 %s158, %s160
      %p162 = scmp.eq.s32.totalorder %s161, 0
      %s164 = sadd.s32 %s163, 1
      %s165 = scalar_select %p162, %s163, %s164
      %p168 = pneg %p162
      %p169 = scmp.eq.s32.totalorder %s14, 3
      %p170 = por %p168, %p169
      %p171 = scmp.ne.s32.totalorder %s163, %s166
      %p172 = scmp.eq.s32.totalorder %s14, 0
      %p173 = por %p171, %p172
      %p174 = scmp.ne.s32.totalorder %s163, %s166
      %p175 = scmp.eq.s32.totalorder %s19, 3
      %p176 = por %p174, %p175
      %p177 = scmp.ne.s32.totalorder %s166, %s167
      %p178 = scmp.eq.s32.totalorder %s19, 0
      %p179 = por %p177, %p178
      %p180 = scmp.ne.s32.totalorder %s166, %s167
      %p181 = scmp.eq.s32.totalorder %s20, 3
      %p182 = por %p180, %p181
      %p184 = scmp.ne.s32.totalorder %s167, %s183
      %p185 = scmp.eq.s32.totalorder %s20, 0
      %p186 = por %p184, %p185
      %p187 = scmp.le.s32.totalorder 1, %s14
      %p188 = scmp.lt.s32.totalorder %s14, 5
      %p189 = pnand %p187, %p188
      %p190 = pneg %p189
      // Predicated region
      $region9: #{tpu_custom_call.1} parent=5 // pred_check
        _
      $region10: #{tpu_custom_call.1} parent=5 // pred_check_branch
        %192 = sbr.rel (%p189) target = $region12
      $region11: #{tpu_custom_call.1} parent=5 // pred_region
        %s193 = ssub.s32 %s14, 1
      $region12: #{tpu_custom_call.1} parent=5 // pred_fallthru
        _
      %p194 = scmp.lt.s32.totalorder %s14, 4
      // Predicated region
      $region13: #{tpu_custom_call.1} parent=5 // pred_check
        %p195 = pneg %p194
      $region14: #{tpu_custom_call.1} parent=5 // pred_check_branch
        %197 = sbr.rel (%p195) target = $region16
      $region15: #{tpu_custom_call.1} parent=5 // pred_region
        // Predicated region
        $region17: #{tpu_custom_call.1} parent=15 // pred_check
          %p198 = pneg %p57
        $region18: #{tpu_custom_call.1} parent=15 // pred_check_branch
          %200 = sbr.rel (%p198) target = $region20
        $region19: #{tpu_custom_call.1} parent=15 // pred_region
          %s201 = smul.u32 %s21, 2
          %s202 = sadd.s32 %s201, %s23
          %s203 = smul.u32 2, %s202
          %p204 = scmp.lt.s32.totalorder %s203, 3
          %s205 = scalar_select %p204, %s203, 3
          %s206 = smul.addr %s205, 4
          %s207 = scalar_lea.vmem %s0, %s206
          %s208 = smul.u32 %s21, 2
          %s209 = sadd.s32 %s208, %s23
          %s210 = smul.u32 2, %s209
        $region20: #{tpu_custom_call.1} parent=15 // pred_fallthru
          _
        // Predicated region
        $region21: #{tpu_custom_call.1} parent=15 // pred_check
          %p211 = pneg %p83
        $region22: #{tpu_custom_call.1} parent=15 // pred_check_branch
          %213 = sbr.rel (%p211) target = $region24
        $region23: #{tpu_custom_call.1} parent=15 // pred_region
          #allocation9 [shape = 'u32[6]{0}', space=smem, size = 0x18, scoped, tag = 'DMA stride descriptor']
          %s214 = sand.u32 %s73, 1
          %s215 = scalar_lea.sflag [#allocation7], %s214
          %s216 = sand.u32 %s73, 1
          %s217 = smul.addr %s216, 192
          %s218 = scalar_lea.vmem [#allocation6], %s217
          %s219 = smul.u32 16, %s22
          %s221 = ssub.s32 3072, 3072
          %222 = vsyncadd %s215, %s221
          %s223 = smul.addr %s219, 64
          %s224 = scalar_lea.hbm %s1, %s223
          %s226 = sshll.u32 1, 14
          %s227 = sxor.u32 4294967295, %s226
          %s229 = sld [smem:[#allocation0]]
          %s230 = sadd.s32 2, %s229
          %s232 = sshll.u32 7, 26
          %s233 = sxor.u32 4294967295, %s232
          %s234 = sand.u32 0, %s233
          %s235 = sshll.u32 %s230, 26
          %s236 = sor.u32 %s234, %s235
          %s237 = sshll.u32 %s218, 4
          %s238 = int_to_ptr.vmem [resolvable:$true] %s237
          %244 = sst [smem:[#allocation9]] 2048
          %s245 = scalar_lea.smem [#allocation9], 1
          %246 = sst [smem:[%s245]] 1024
          %s247 = scalar_lea.smem [#allocation9], 2
          %248 = sst [smem:[%s247]] 16
          %s249 = scalar_lea.smem [#allocation9], 3
          %250 = sst [smem:[%s249]] 64
          %s251 = scalar_lea.smem [#allocation9], 4
          %252 = sst [smem:[%s251]] 64
          %s253 = scalar_lea.smem [#allocation9], 5
          %254 = sst [smem:[%s253]] 4
          %256 = dma.general %s224, 3072, %s238, %s215, [#allocation8], [#allocation9], %s236, 0
        $region24: #{tpu_custom_call.1} parent=15 // pred_fallthru
          _
        // Predicated region
        $region25: #{tpu_custom_call.1} parent=15 // pred_check
          %p257 = pneg %p113
        $region26: #{tpu_custom_call.1} parent=15 // pred_check_branch
          %259 = sbr.rel (%p257) target = $region28
        $region27: #{tpu_custom_call.1} parent=15 // pred_region
          %s260 = smul.u32 %s21, 2
          %s261 = sadd.s32 %s260, %s23
          %s262 = smul.u32 2, %s261
          %p263 = scmp.lt.s32.totalorder %s262, 3
          %s264 = scalar_select %p263, %s262, 3
          %s265 = smul.addr %s264, 8
          %s266 = scalar_lea.vmem %s2, %s265
          %s267 = smul.u32 %s21, 2
          %s268 = sadd.s32 %s267, %s23
          %s269 = smul.u32 2, %s268
        $region28: #{tpu_custom_call.1} parent=15 // pred_fallthru
          _
      $region16: #{tpu_custom_call.1} parent=5 // pred_fallthru
        _
      %p270 = scmp.le.s32.totalorder 1, %s14
      %p271 = scmp.lt.s32.totalorder %s14, 5
      %p272 = pnand %p270, %p271
      %p273 = pneg %p272
      // Predicated region
      $region29: #{tpu_custom_call.1} parent=5 // pred_check
        _
      $region30: #{tpu_custom_call.1} parent=5 // pred_check_branch
        %275 = sbr.rel (%p272) target = $region32
      $region31: #{tpu_custom_call.1} parent=5 // pred_region
        %s276 = ssub.s32 %s14, 1
        %s277 = sand.u32 %s76, 1
        %s278 = scalar_lea.sflag [#allocation7], %s277
        %s279 = sand.u32 %s76, 1
        %s280 = smul.addr %s279, 192
        %s281 = scalar_lea.vmem [#allocation6], %s280
        // Predicated region
        $region33: #{tpu_custom_call.1} parent=31 // pred_check
          %p282 = pneg %p89
        $region34: #{tpu_custom_call.1} parent=31 // pred_check_branch
          %284 = sbr.rel (%p282) target = $region36
        $region35: #{tpu_custom_call.1} parent=31 // pred_region
          %285 = dma.done %s278, 3072
        $region36: #{tpu_custom_call.1} parent=31 // pred_fallthru
          _
        %s286 = smul.u32 %s24, 2
        %s287 = sadd.s32 %s286, %s26
        %s288 = smul.u32 2, %s287
        %p289 = scmp.lt.s32.totalorder %s288, 3
        %s290 = scalar_select %p289, %s288, 3
        %s291 = smul.addr %s290, 4
        %s292 = scalar_lea.vmem %s0, %s291
        %p293 = pneg %p63
        %p294 = pneg %p60
        %s295 = sand.u32 %s76, 1
        %s296 = scalar_lea.sflag [#allocation7], %s295
        %s297 = sand.u32 %s76, 1
        %s298 = smul.addr %s297, 192
        %s299 = scalar_lea.vmem [#allocation6], %s298
        %p300 = pneg %p89
        %p301 = pneg %p86
        %s302 = smul.u32 %s24, 2
        %s303 = sadd.s32 %s302, %s26
        %s304 = smul.u32 2, %s303
        %p305 = scmp.lt.s32.totalorder %s304, 3
        %s306 = scalar_select %p305, %s304, 3
        %s307 = smul.addr %s306, 8
        %s308 = scalar_lea.vmem %s2, %s307
        %p309 = pneg %p119
        %p310 = pneg %p116
        %p311 = pneg %p149
        %p312 = pneg %p146
        %s313 = smul.u32 %s24, 2
        %s314 = sadd.s32 %s313, %s26
        %s315 = smul.u32 2, %s314
        %p316 = scmp.lt.s32.totalorder %s315, 3
        %s317 = scalar_select %p316, %s315, 3
        %s318 = smul.addr %s317, 8
        %s319 = scalar_lea.vmem %s3, %s318
        %p320 = pneg %p179
        %p321 = pneg %p176
        %s322 = smul.u32 %s24, 2
        %s323 = sadd.s32 %s322, %s26
        %s324 = smul.u32 2, %s323
        %p325 = scmp.lt.s32.totalorder %s324, 3
        %s326 = scalar_select %p325, %s324, 3
        %s327 = smul.addr %s326, 8
        %s328 = scalar_lea.vmem %s4, %s327
        %s329 = smul.u32 %s24, 2
        %s330 = sadd.s32 %s329, %s26
        %s331 = smul.u32 2, %s330
        %p332 = scmp.lt.s32.totalorder %s331, 3
        %s333 = scalar_select %p332, %s331, 3
        %s334 = smul.addr %s333, 4
        %s335 = scalar_lea.vmem %s0, %s334
        %s336 = smul.u32 %s24, 2
        %s337 = sadd.s32 %s336, %s26
        %s338 = smul.u32 2, %s337
        %s339 = smul.u32 16, %s25
        %s340 = smul.u32 %s24, 2
        %s341 = sadd.s32 %s340, %s26
        %s342 = smul.u32 2, %s341
        %p343 = scmp.lt.s32.totalorder %s342, 3
        %s344 = scalar_select %p343, %s342, 3
        %s345 = smul.addr %s344, 8
        %s346 = scalar_lea.vmem %s2, %s345
        %s347 = smul.u32 %s24, 2
        %s348 = sadd.s32 %s347, %s26
        %s349 = smul.u32 2, %s348
        %s350 = smul.u32 %s24, 2
        %s351 = sadd.s32 %s350, %s26
        %s352 = smul.u32 2, %s351
        %p353 = scmp.lt.s32.totalorder %s352, 3
        %s354 = scalar_select %p353, %s352, 3
        %s355 = smul.addr %s354, 8
        %s356 = scalar_lea.vmem %s3, %s355
        %s357 = smul.u32 %s24, 2
        %s358 = sadd.s32 %s357, %s26
        %s359 = smul.u32 2, %s358
        %s360 = smul.u32 %s24, 2
        %s361 = sadd.s32 %s360, %s26
        %s362 = smul.u32 2, %s361
        %p363 = scmp.lt.s32.totalorder %s362, 3
        %s364 = scalar_select %p363, %s362, 3
        %s365 = smul.addr %s364, 8
        %s366 = scalar_lea.vmem %s4, %s365
        %s367 = smul.u32 %s24, 2
        %s368 = sadd.s32 %s367, %s26
        %s369 = smul.u32 2, %s368
        %p371 = scmp.eq.s32.totalorder %s25, 0
        // Predicated region
        $region37: #{tpu_custom_call.1} parent=31 // pred_check
          %p372 = pneg %p371
        $region38: #{tpu_custom_call.1} parent=31 // pred_check_branch
          %374 = sbr.rel (%p372) target = $region40
        $region39: #{tpu_custom_call.1} parent=31 // pred_region
          %s375 = smul.u32 %s26, 16
          %s376 = scalar_lea.vmem [#allocation2], %s375
          %vm377 = vcmask 7168
          %378 = vst.msk [vmem:[%s376] sm:$0xff] %vm377, -1e+30
          %379 = vst.msk [vmem:[%s376 + $0x8] sm:$0xff] %vm377, -1e+30
          %s380 = scalar_lea.vmem [#allocation3], %s375
          %381 = vst.msk [vmem:[%s380] sm:$0xff] %vm377, 0.0
          %382 = vst.msk [vmem:[%s380 + $0x8] sm:$0xff] %vm377, 0.0
          %s383 = scalar_lea.vmem [#allocation4], %s375
          %384 = vst.msk [vmem:[%s383] sm:$0xff] %vm377, 0.0
          %385 = vst.msk [vmem:[%s383 + $0x8] sm:$0xff] %vm377, 0.0
          %s386 = scalar_lea.vmem [#allocation5], %s375
          %387 = vst.msk [vmem:[%s386] sm:$0xff] %vm377, 0
          %388 = vst.msk [vmem:[%s386 + $0x8] sm:$0xff] %vm377, 0
        $region40: #{tpu_custom_call.1} parent=31 // pred_fallthru
          _
        %v389 = vld [vmem:[%s335] sm:$0xf]
        %v390 = vld [vmem:[%s335 + $0x4] sm:$0xf]
        %v391 = vld [vmem:[%s281] sm:$0xf]
        %v392 = vld [vmem:[%s281 + $0x4] sm:$0xf]
        %v393 = vld [vmem:[%s281 + $0x8] sm:$0xf]
        %v394 = vld [vmem:[%s281 + $0xc] sm:$0xf]
        %v395 = vld [vmem:[%s281 + $0x10] sm:$0xf]
        %v396 = vld [vmem:[%s281 + $0x14] sm:$0xf]
        %v397 = vld [vmem:[%s281 + $0x18] sm:$0xf]
        %v398 = vld [vmem:[%s281 + $0x1c] sm:$0xf]
        %v399 = vld [vmem:[%s281 + $0x20] sm:$0xf]
        %v400 = vld [vmem:[%s281 + $0x24] sm:$0xf]
        %v401 = vld [vmem:[%s281 + $0x28] sm:$0xf]
        %v402 = vld [vmem:[%s281 + $0x2c] sm:$0xf]
        %v403 = vld [vmem:[%s281 + $0x30] sm:$0xf]
        %v404 = vld [vmem:[%s281 + $0x34] sm:$0xf]
        %v405 = vld [vmem:[%s281 + $0x38] sm:$0xf]
        %v406 = vld [vmem:[%s281 + $0x3c] sm:$0xf]
        %v409 = vunpack.c.l.b16 %v389
        %v410 = vunpack.c.l.b16 %v390
        %v411 = vpack.c.b16 %v410, %v409
        %v429 = vunpack.c.l.b16 %v391
        %v430 = vunpack.c.l.b16 %v392
        %v431 = vunpack.c.l.b16 %v393
        %v432 = vunpack.c.l.b16 %v394
        %v433 = vunpack.c.l.b16 %v395
        %v434 = vunpack.c.l.b16 %v396
        %v435 = vunpack.c.l.b16 %v397
        %v436 = vunpack.c.l.b16 %v398
        %v437 = vunpack.c.l.b16 %v399
        %v438 = vunpack.c.l.b16 %v400
        %v439 = vunpack.c.l.b16 %v401
        %v440 = vunpack.c.l.b16 %v402
        %v441 = vunpack.c.l.b16 %v403
        %v442 = vunpack.c.l.b16 %v404
        %v443 = vunpack.c.l.b16 %v405
        %v444 = vunpack.c.l.b16 %v406
        %v445 = vpack.c.b16 %v430, %v429
        %v446 = vpack.c.b16 %v432, %v431
        %v447 = vpack.c.b16 %v434, %v433
        %v448 = vpack.c.b16 %v436, %v435
        %v449 = vpack.c.b16 %v438, %v437
        %v450 = vpack.c.b16 %v440, %v439
        %v451 = vpack.c.b16 %v442, %v441
        %v452 = vpack.c.b16 %v444, %v443
        %461 = vmatprep.subr.bf16.mxu0 0
        %462 = vmatpush1.bf16.xpose.msra.mxu0 %v445
        %463 = vmatprep.subr.bf16.mxu0 0
        %464 = vmatpush1.bf16.xpose.msra.mxu0 %v446
        %465 = vmatprep.subr.bf16.mxu0 0
        %466 = vmatpush1.bf16.xpose.msra.mxu0 %v447
        %467 = vmatprep.subr.bf16.mxu0 0
        %468 = vmatpush1.bf16.xpose.msra.mxu0 %v448
        %469 = vmatprep.subr.bf16.mxu0 0
        %470 = vmatpush1.bf16.xpose.msra.mxu0 %v449
        %471 = vmatprep.subr.bf16.mxu0 0
        %472 = vmatpush1.bf16.xpose.msra.mxu0 %v450
        %473 = vmatprep.subr.bf16.mxu0 0
        %474 = vmatpush1.bf16.xpose.msra.mxu0 %v451
        %475 = vmatprep.subr.bf16.mxu0 0
        %476 = vmatpush1.bf16.xpose.msra.mxu0 %v452
        %477 = vmatprep.subr.bf16.mxu0 0
        %478 = vmatpush1.bf16.xpose.msra.mxu0 0
        %479 = vmatprep.subr.bf16.mxu0 0
        %480 = vmatpush1.bf16.xpose.msra.mxu0 0
        %481 = vmatprep.subr.bf16.mxu0 0
        %482 = vmatpush1.bf16.xpose.msra.mxu0 0
        %483 = vmatprep.subr.bf16.mxu0 0
        %484 = vmatpush1.bf16.xpose.msra.mxu0 0
        %485 = vmatprep.subr.bf16.mxu0 0
        %486 = vmatpush1.bf16.xpose.msra.mxu0 0
        %487 = vmatprep.subr.bf16.mxu0 0
        %488 = vmatpush1.bf16.xpose.msra.mxu0 0
        %489 = vmatprep.subr.bf16.mxu0 0
        %490 = vmatpush1.bf16.xpose.msra.mxu0 0
        %491 = vmatprep.subr.bf16.mxu0 0
        %492 = vmatpush1.bf16.xpose.msra.mxu0 0
        %493 = vmatprep.mubr.bf16.mxu0 0
        %494 = vmatmul.mubr.bf16.gmra.mrb[0].mxu0 %v411
        %v495 = vpop.f32.mrb[0].mxu0
        %v496 = vadd.f32 0.0, %v495
        %v497 = vpop.f32.mrb[0].mxu0
        %v498 = vpop.f32.mrb[0].mxu0
        %v499 = vadd.f32 0.0, %v498
        %v500 = vpop.f32.mrb[0].mxu0
        %501 = vdwg.mxu0
        %s502 = scalar_lea.vmem %s281, 64 [#allocation6]
        %v503 = vld [vmem:[%s502] sm:$0xf]
        %v504 = vld [vmem:[%s502 + $0x4] sm:$0xf]
        %v505 = vld [vmem:[%s502 + $0x8] sm:$0xf]
        %v506 = vld [vmem:[%s502 + $0xc] sm:$0xf]
        %v507 = vld [vmem:[%s502 + $0x10] sm:$0xf]
        %v508 = vld [vmem:[%s502 + $0x14] sm:$0xf]
        %v509 = vld [vmem:[%s502 + $0x18] sm:$0xf]
        %v510 = vld [vmem:[%s502 + $0x1c] sm:$0xf]
        %v511 = vld [vmem:[%s502 + $0x20] sm:$0xf]
        %v512 = vld [vmem:[%s502 + $0x24] sm:$0xf]
        %v513 = vld [vmem:[%s502 + $0x28] sm:$0xf]
        %v514 = vld [vmem:[%s502 + $0x2c] sm:$0xf]
        %v515 = vld [vmem:[%s502 + $0x30] sm:$0xf]
        %v516 = vld [vmem:[%s502 + $0x34] sm:$0xf]
        %v517 = vld [vmem:[%s502 + $0x38] sm:$0xf]
        %v518 = vld [vmem:[%s502 + $0x3c] sm:$0xf]
        %v535 = vunpack.c.l.b16 %v503
        %v536 = vunpack.c.l.b16 %v504
        %v537 = vunpack.c.l.b16 %v505
        %v538 = vunpack.c.l.b16 %v506
        %v539 = vunpack.c.l.b16 %v507
        %v540 = vunpack.c.l.b16 %v508
        %v541 = vunpack.c.l.b16 %v509
        %v542 = vunpack.c.l.b16 %v510
        %v543 = vunpack.c.l.b16 %v511
        %v544 = vunpack.c.l.b16 %v512
        %v545 = vunpack.c.l.b16 %v513
        %v546 = vunpack.c.l.b16 %v514
        %v547 = vunpack.c.l.b16 %v515
        %v548 = vunpack.c.l.b16 %v516
        %v549 = vunpack.c.l.b16 %v517
        %v550 = vunpack.c.l.b16 %v518
        %v551 = vpack.c.b16 %v536, %v535
        %v552 = vpack.c.b16 %v538, %v537
        %v553 = vpack.c.b16 %v540, %v539
        %v554 = vpack.c.b16 %v542, %v541
        %v555 = vpack.c.b16 %v544, %v543
        %v556 = vpack.c.b16 %v546, %v545
        %v557 = vpack.c.b16 %v548, %v547
        %v558 = vpack.c.b16 %v550, %v549
        %567 = vmatprep.subr.bf16.mxu0 0
        %568 = vmatpush1.bf16.xpose.msra.mxu0 %v551
        %569 = vmatprep.subr.bf16.mxu0 0
        %570 = vmatpush1.bf16.xpose.msra.mxu0 %v552
        %571 = vmatprep.subr.bf16.mxu0 0
        %572 = vmatpush1.bf16.xpose.msra.mxu0 %v553
        %573 = vmatprep.subr.bf16.mxu0 0
        %574 = vmatpush1.bf16.xpose.msra.mxu0 %v554
        %575 = vmatprep.subr.bf16.mxu0 0
        %576 = vmatpush1.bf16.xpose.msra.mxu0 %v555
        %577 = vmatprep.subr.bf16.mxu0 0
        %578 = vmatpush1.bf16.xpose.msra.mxu0 %v556
        %579 = vmatprep.subr.bf16.mxu0 0
        %580 = vmatpush1.bf16.xpose.msra.mxu0 %v557
        %581 = vmatprep.subr.bf16.mxu0 0
        %582 = vmatpush1.bf16.xpose.msra.mxu0 %v558
        %583 = vmatprep.subr.bf16.mxu0 0
        %584 = vmatpush1.bf16.xpose.msra.mxu0 0
        %585 = vmatprep.subr.bf16.mxu0 0
        %586 = vmatpush1.bf16.xpose.msra.mxu0 0
        %587 = vmatprep.subr.bf16.mxu0 0
        %588 = vmatpush1.bf16.xpose.msra.mxu0 0
        %589 = vmatprep.subr.bf16.mxu0 0
        %590 = vmatpush1.bf16.xpose.msra.mxu0 0
        %591 = vmatprep.subr.bf16.mxu0 0
        %592 = vmatpush1.bf16.xpose.msra.mxu0 0
        %593 = vmatprep.subr.bf16.mxu0 0
        %594 = vmatpush1.bf16.xpose.msra.mxu0 0
        %595 = vmatprep.subr.bf16.mxu0 0
        %596 = vmatpush1.bf16.xpose.msra.mxu0 0
        %597 = vmatprep.subr.bf16.mxu0 0
        %598 = vmatpush1.bf16.xpose.msra.mxu0 0
        %599 = vmatprep.mubr.bf16.mxu0 0
        %600 = vmatmul.mubr.bf16.gmra.mrb[0].mxu0 %v411
        %v601 = vpop.f32.mrb[0].mxu0
        %v602 = vadd.f32 0.0, %v601
        %v603 = vpop.f32.mrb[0].mxu0
        %v604 = vpop.f32.mrb[0].mxu0
        %v605 = vadd.f32 0.0, %v604
        %v606 = vpop.f32.mrb[0].mxu0
        %607 = vdwg.mxu0
        %v608 = vmax.f32 %v496, %v602
        %v609 = vmax.f32 %v499, %v605
        %s610 = scalar_lea.vmem %s281, 128 [#allocation6]
        %v611 = vld [vmem:[%s610] sm:$0xf]
        %v612 = vld [vmem:[%s610 + $0x4] sm:$0xf]
        %v613 = vld [vmem:[%s610 + $0x8] sm:$0xf]
        %v614 = vld [vmem:[%s610 + $0xc] sm:$0xf]
        %v615 = vld [vmem:[%s610 + $0x10] sm:$0xf]
        %v616 = vld [vmem:[%s610 + $0x14] sm:$0xf]
        %v617 = vld [vmem:[%s610 + $0x18] sm:$0xf]
        %v618 = vld [vmem:[%s610 + $0x1c] sm:$0xf]
        %v619 = vld [vmem:[%s610 + $0x20] sm:$0xf]
        %v620 = vld [vmem:[%s610 + $0x24] sm:$0xf]
        %v621 = vld [vmem:[%s610 + $0x28] sm:$0xf]
        %v622 = vld [vmem:[%s610 + $0x2c] sm:$0xf]
        %v623 = vld [vmem:[%s610 + $0x30] sm:$0xf]
        %v624 = vld [vmem:[%s610 + $0x34] sm:$0xf]
        %v625 = vld [vmem:[%s610 + $0x38] sm:$0xf]
        %v626 = vld [vmem:[%s610 + $0x3c] sm:$0xf]
        %v643 = vunpack.c.l.b16 %v611
        %v644 = vunpack.c.l.b16 %v612
        %v645 = vunpack.c.l.b16 %v613
        %v646 = vunpack.c.l.b16 %v614
        %v647 = vunpack.c.l.b16 %v615
        %v648 = vunpack.c.l.b16 %v616
        %v649 = vunpack.c.l.b16 %v617
        %v650 = vunpack.c.l.b16 %v618
        %v651 = vunpack.c.l.b16 %v619
        %v652 = vunpack.c.l.b16 %v620
        %v653 = vunpack.c.l.b16 %v621
        %v654 = vunpack.c.l.b16 %v622
        %v655 = vunpack.c.l.b16 %v623
        %v656 = vunpack.c.l.b16 %v624
        %v657 = vunpack.c.l.b16 %v625
        %v658 = vunpack.c.l.b16 %v626
        %v659 = vpack.c.b16 %v644, %v643
        %v660 = vpack.c.b16 %v646, %v645
        %v661 = vpack.c.b16 %v648, %v647
        %v662 = vpack.c.b16 %v650, %v649
        %v663 = vpack.c.b16 %v652, %v651
        %v664 = vpack.c.b16 %v654, %v653
        %v665 = vpack.c.b16 %v656, %v655
        %v666 = vpack.c.b16 %v658, %v657
        %675 = vmatprep.subr.bf16.mxu0 0
        %676 = vmatpush1.bf16.xpose.msra.mxu0 %v659
        %677 = vmatprep.subr.bf16.mxu0 0
        %678 = vmatpush1.bf16.xpose.msra.mxu0 %v660
        %679 = vmatprep.subr.bf16.mxu0 0
        %680 = vmatpush1.bf16.xpose.msra.mxu0 %v661
        %681 = vmatprep.subr.bf16.mxu0 0
        %682 = vmatpush1.bf16.xpose.msra.mxu0 %v662
        %683 = vmatprep.subr.bf16.mxu0 0
        %684 = vmatpush1.bf16.xpose.msra.mxu0 %v663
        %685 = vmatprep.subr.bf16.mxu0 0
        %686 = vmatpush1.bf16.xpose.msra.mxu0 %v664
        %687 = vmatprep.subr.bf16.mxu0 0
        %688 = vmatpush1.bf16.xpose.msra.mxu0 %v665
        %689 = vmatprep.subr.bf16.mxu0 0
        %690 = vmatpush1.bf16.xpose.msra.mxu0 %v666
        %691 = vmatprep.subr.bf16.mxu0 0
        %692 = vmatpush1.bf16.xpose.msra.mxu0 0
        %693 = vmatprep.subr.bf16.mxu0 0
        %694 = vmatpush1.bf16.xpose.msra.mxu0 0
        %695 = vmatprep.subr.bf16.mxu0 0
        %696 = vmatpush1.bf16.xpose.msra.mxu0 0
        %697 = vmatprep.subr.bf16.mxu0 0
        %698 = vmatpush1.bf16.xpose.msra.mxu0 0
        %699 = vmatprep.subr.bf16.mxu0 0
        %700 = vmatpush1.bf16.xpose.msra.mxu0 0
        %701 = vmatprep.subr.bf16.mxu0 0
        %702 = vmatpush1.bf16.xpose.msra.mxu0 0
        %703 = vmatprep.subr.bf16.mxu0 0
        %704 = vmatpush1.bf16.xpose.msra.mxu0 0
        %705 = vmatprep.subr.bf16.mxu0 0
        %706 = vmatpush1.bf16.xpose.msra.mxu0 0
        %707 = vmatprep.mubr.bf16.mxu0 0
        %708 = vmatmul.mubr.bf16.gmra.mrb[0].mxu0 %v411
        %v709 = vpop.f32.mrb[0].mxu0
        %v710 = vadd.f32 0.0, %v709
        %v711 = vpop.f32.mrb[0].mxu0
        %v712 = vpop.f32.mrb[0].mxu0
        %v713 = vadd.f32 0.0, %v712
        %v714 = vpop.f32.mrb[0].mxu0
        %715 = vdwg.mxu0
        %v716 = vmax.f32 %v608, %v710
        %v717 = vmax.f32 %v609, %v713
        %v718 = vmul.f32 %v716, %v716
        %v719 = vmul.f32 %v717, %v717
        %v720 = vsub.f32 1.0, %v718
        %v721 = vsub.f32 1.0, %v719
        %v722 = vmax.f32 %v720, 0.0
        %v723 = vmax.f32 %v721, 0.0
        %v724 = vrsqrt.pop %v722
        %v725 = vmul.f32 %v722, %v724
        %vm726 = vcmp.eq.f32.partialorder %v722, inf
        %v727 = vsel %vm726, %v722, %v725
        %vm728 = vcmp.eq.f32.partialorder %v722, 0.0
        %v729 = vand.u32 %v722, 2147483648
        %v730 = vsel %vm728, %v729, %v727
        %v731 = vrsqrt.pop %v723
        %v732 = vmul.f32 %v723, %v731
        %vm733 = vcmp.eq.f32.partialorder %v723, inf
        %v734 = vsel %vm733, %v723, %v732
        %vm735 = vcmp.eq.f32.partialorder %v723, 0.0
        %v736 = vand.u32 %v723, 2147483648
        %v737 = vsel %vm735, %v736, %v734
        %v738 = vmul.f32 %v716, 0.87758255
        %v739 = vmul.f32 %v717, 0.87758255
        %v740 = vmul.f32 %v730, 0.47942555
        %v741 = vmul.f32 %v737, 0.47942555
        %v742 = vsub.f32 %v738, %v740
        %v743 = vsub.f32 %v739, %v741
        %v744 = vsub.f32 %v716, -0.87758255
        %v745 = vsub.f32 %v717, -0.87758255
        %vm746 = vcmp.gt.f32.partialorder %v744, 0.0
        %vm747 = vcmp.gt.f32.partialorder %v745, 0.0
        %v748 = vsub.f32 %v716, 0.23971277
        %v749 = vsub.f32 %v717, 0.23971277
        %v750 = vsel %vm746, %v742, %v748
        %v751 = vsel %vm747, %v743, %v749
        %v752 = vld [vmem:[%s346] sm:$0xff]
        %v753 = vld [vmem:[%s346 + $0x8] sm:$0xff]
        %v754 = vlaneseq
        %v755 = vand.u32 %v754, 127
        %s756 = smul.u32 %s25, 128
        %v757 = vstv %s756
        %v758 = vadd.s32 %v757, %v755
        %759 = vset.pattern.permute.xlu0 0
        %760 = vperm.xlu0 %759, %v752
        %v761 = vpop.permute.xlu0 %760
        %762 = vset.pattern.permute.xlu0 0
        %763 = vperm.xlu0 %762, %v753
        %v764 = vpop.permute.xlu0 %763
        %vm765 = vcmp.eq.s32.totalorder %v758, %v761
        %vm766 = vcmp.eq.s32.totalorder %v758, %v764
        %v767 = vsel %vm765, %v750, %v716
        %v768 = vsel %vm766, %v751, %v717
        %v769 = vmul.f32 %v767, 30.0
        %v770 = vmul.f32 %v768, 30.0
        %vm771 = vcmp.lt.s32.totalorder %v758, 200
        %v772 = vsel %vm771, %v769, -1e+30
        %v773 = vsel %vm771, %v770, -1e+30
        %s774 = smul.u32 %s26, 16
        %s775 = scalar_lea.vmem [#allocation2], %s774
        %v776 = vld [vmem:[%s775] sm:$0xff]
        %v777 = vld [vmem:[%s775 + $0x8] sm:$0xff]
        %778 = vmax.xlane.f32.xlu0 %v772
        %v779 = vpop.xlane.xlu0 %778
        %780 = vmax.xlane.f32.xlu0 %v773
        %v781 = vpop.xlane.xlu0 %780
        %v782 = vmax.f32 %v776, %v779
        %v783 = vmax.f32 %v777, %v781
        %s784 = scalar_lea.vmem [#allocation3], %s774
        %v785 = vld [vmem:[%s784] sm:$0xff]
        %v786 = vld [vmem:[%s784 + $0x8] sm:$0xff]
        %v787 = vsub.f32 %v776, %v782
        %v788 = vsub.f32 %v777, %v783
        %v789 = vmul.f32 %v787, 1.442695
        %v790 = vpow.pop %v789
        %v791 = vmul.f32 %v788, 1.442695
        %v792 = vpow.pop %v791
        %v793 = vmul.f32 %v785, %v790
        %v794 = vmul.f32 %v786, %v792
        %796 = vset.pattern.permute.xlu0 0
        %797 = vperm.xlu0 %796, %v782
        %v798 = vpop.permute.xlu0 %797
        %801 = vset.pattern.permute.xlu0 0
        %802 = vperm.xlu0 %801, %v783
        %v803 = vpop.permute.xlu0 %802
        %v805 = vsub.f32 %v772, %v798
        %v806 = vsub.f32 %v773, %v803
        %v807 = vmul.f32 %v805, 1.442695
        %v808 = vpow.pop %v807
        %v809 = vmul.f32 %v806, 1.442695
        %v810 = vpow.pop %v809
        %811 = vadd.xlane.f32.xlu0 %v808
        %v812 = vpop.xlane.xlu0 %811
        %813 = vadd.xlane.f32.xlu0 %v810
        %v814 = vpop.xlane.xlu0 %813
        %v815 = vadd.f32 %v793, %v812
        %v816 = vadd.f32 %v794, %v814
        %vm817 = vcmask 7168
        %818 = vst.msk [vmem:[%s784] sm:$0xff] %vm817, %v815
        %819 = vst.msk [vmem:[%s784 + $0x8] sm:$0xff] %vm817, %v816
        %820 = vst.msk [vmem:[%s775] sm:$0xff] %vm817, %v782
        %821 = vst.msk [vmem:[%s775 + $0x8] sm:$0xff] %vm817, %v783
        %s822 = scalar_lea.vmem [#allocation4], %s774
        %v823 = vld [vmem:[%s822] sm:$0xff]
        %v824 = vld [vmem:[%s822 + $0x8] sm:$0xff]
        %v825 = vsel %vm765, %v772, 0.0
        %v826 = vsel %vm766, %v773, 0.0
        %827 = vadd.xlane.f32.xlu0 %v825
        %v828 = vpop.xlane.xlu0 %827
        %829 = vadd.xlane.f32.xlu0 %v826
        %v830 = vpop.xlane.xlu0 %829
        %v831 = vadd.f32 %v823, %v828
        %v832 = vadd.f32 %v824, %v830
        %833 = vst.msk [vmem:[%s822] sm:$0xff] %vm817, %v831
        %834 = vst.msk [vmem:[%s822 + $0x8] sm:$0xff] %vm817, %v832
        %vm835 = vcmp.eq.f32.partialorder %v772, %v779
        %vm836 = vcmp.eq.f32.partialorder %v773, %v781
        %v837 = vsel %vm835, %v755, 128
        %v838 = vsel %vm836, %v755, 128
        %v839 = vand.u32 %v837, 65535
        %v840 = vshra.s32 %v837, 16
        %v841 = vcvt.s32.f32 %v839
        %v842 = vcvt.s32.f32 %v840
        %843 = vmin.xlane.f32.xlu0 %v842
        %v844 = vpop.xlane.xlu0 %843
        %vm845 = vcmp.eq.f32.partialorder %v842, %v844
        %v846 = vsel %vm845, %v841, inf
        %847 = vmin.xlane.f32.xlu0 %v846
        %v848 = vpop.xlane.xlu0 %847
        %v849 = vcvt.f32.s32 %v848
        %v850 = vcvt.f32.s32 %v844
        %v851 = vshll.u32 %v850, 16
        %v852 = vadd.s32 %v851, %v849
        %v853 = vand.u32 %v838, 65535
        %v854 = vshra.s32 %v838, 16
        %v855 = vcvt.s32.f32 %v853
        %v856 = vcvt.s32.f32 %v854
        %857 = vmin.xlane.f32.xlu0 %v856
        %v858 = vpop.xlane.xlu0 %857
        %vm859 = vcmp.eq.f32.partialorder %v856, %v858
        %v860 = vsel %vm859, %v855, inf
        %861 = vmin.xlane.f32.xlu0 %v860
        %v862 = vpop.xlane.xlu0 %861
        %v863 = vcvt.f32.s32 %v862
        %v864 = vcvt.f32.s32 %v858
        %v865 = vshll.u32 %v864, 16
        %v866 = vadd.s32 %v865, %v863
        %v867 = vadd.s32 %v852, %v757
        %v868 = vadd.s32 %v866, %v757
        %vm869 = vcmp.gt.f32.partialorder %v779, %v776
        %vm870 = vcmp.gt.f32.partialorder %v781, %v777
        %s871 = scalar_lea.vmem [#allocation5], %s774
        %v872 = vld [vmem:[%s871] sm:$0xff]
        %v873 = vld [vmem:[%s871 + $0x8] sm:$0xff]
        %v874 = vsel %vm869, %v867, %v872
        %v875 = vsel %vm870, %v868, %v873
        %876 = vst.msk [vmem:[%s871] sm:$0xff] %vm817, %v874
        %877 = vst.msk [vmem:[%s871 + $0x8] sm:$0xff] %vm817, %v875
        %p878 = scmp.eq.s32.totalorder %s25, 1
        // Predicated region
        $region41: #{tpu_custom_call.1} parent=31 // pred_check
          %p879 = pneg %p878
        $region42: #{tpu_custom_call.1} parent=31 // pred_check_branch
          %881 = sbr.rel (%p879) target = $region44
        $region43: #{tpu_custom_call.1} parent=31 // pred_region
          %v882 = vld [vmem:[%s784] sm:$0xff]
          %v883 = vld [vmem:[%s784 + $0x8] sm:$0xff]
          %v884 = vlog2.pop %v882
          %v885 = vmul.f32 %v884, 0.6931472
          %v886 = vlog2.pop %v883
          %v887 = vmul.f32 %v886, 0.6931472
          %v888 = vld [vmem:[%s775] sm:$0xff]
          %v889 = vld [vmem:[%s775 + $0x8] sm:$0xff]
          %v890 = vadd.f32 %v885, %v888
          %v891 = vadd.f32 %v887, %v889
          %v892 = vld [vmem:[%s822] sm:$0xff]
          %v893 = vld [vmem:[%s822 + $0x8] sm:$0xff]
          %v894 = vsub.f32 %v890, %v892
          %v895 = vsub.f32 %v891, %v893
          %896 = vst.msk [vmem:[%s356] sm:$0xff] %vm817, %v894
          %897 = vst.msk [vmem:[%s356 + $0x8] sm:$0xff] %vm817, %v895
          %v898 = vld [vmem:[%s871] sm:$0xff]
          %v899 = vld [vmem:[%s871 + $0x8] sm:$0xff]
          %vm900 = vcmp.eq.s32.totalorder %v898, %v752
          %vm901 = vcmp.eq.s32.totalorder %v899, %v753
          %v902 = vsel %vm900, 1, 0
          %v903 = vsel %vm901, 1, 0
          %v904 = vcvt.s32.f32 %v902
          %v905 = vcvt.s32.f32 %v903
          %906 = vst.msk [vmem:[%s366] sm:$0xff] %vm817, %v904
          %907 = vst.msk [vmem:[%s366 + $0x8] sm:$0xff] %vm817, %v905
        $region44: #{tpu_custom_call.1} parent=31 // pred_fallthru
          _
        %s908 = smul.u32 %s24, 2
        %s909 = sadd.s32 %s908, %s26
        %s910 = smul.u32 2, %s909
        %p911 = scmp.lt.s32.totalorder %s910, 3
        %s912 = scalar_select %p911, %s910, 3
        %s913 = smul.addr %s912, 8
        %s914 = scalar_lea.vmem %s3, %s913
        %s915 = smul.u32 %s24, 2
        %s916 = sadd.s32 %s915, %s26
        %s917 = smul.u32 2, %s916
        %p918 = scmp.lt.s32.totalorder %s917, 3
        %s919 = scalar_select %p918, %s917, 3
        %s920 = smul.addr %s919, 8
        %s921 = scalar_lea.vmem %s4, %s920
        // Predicated region
        $region45: #{tpu_custom_call.1} parent=31 // pred_check
          %p922 = pneg %p146
        $region46: #{tpu_custom_call.1} parent=31 // pred_check_branch
          %924 = sbr.rel (%p922) target = $region48
        $region47: #{tpu_custom_call.1} parent=31 // pred_region
          %s925 = smul.u32 %s24, 2
          %s926 = sadd.s32 %s925, %s26
          %s927 = smul.u32 2, %s926
        $region48: #{tpu_custom_call.1} parent=31 // pred_fallthru
          _
        // Predicated region
        $region49: #{tpu_custom_call.1} parent=31 // pred_check
          %p928 = pneg %p176
        $region50: #{tpu_custom_call.1} parent=31 // pred_check_branch
          %930 = sbr.rel (%p928) target = $region52
        $region51: #{tpu_custom_call.1} parent=31 // pred_region
          %s931 = smul.u32 %s24, 2
          %s932 = sadd.s32 %s931, %s26
          %s933 = smul.u32 2, %s932
        $region52: #{tpu_custom_call.1} parent=31 // pred_fallthru
          _
      $region32: #{tpu_custom_call.1} parent=5 // pred_fallthru
        _
      %p934 = scmp.le.s32.totalorder 2, %s14
      // Predicated region
      $region53: #{tpu_custom_call.1} parent=5 // pred_check
        %p935 = pneg %p934
      $region54: #{tpu_custom_call.1} parent=5 // pred_check_branch
        %937 = sbr.rel (%p935) target = $region56
      $region55: #{tpu_custom_call.1} parent=5 // pred_region
        %s938 = ssub.s32 %s14, 2
        // Predicated region
        $region57: #{tpu_custom_call.1} parent=55 // pred_check
          %p939 = pneg %p152
        $region58: #{tpu_custom_call.1} parent=55 // pred_check_branch
          %941 = sbr.rel (%p939) target = $region60
        $region59: #{tpu_custom_call.1} parent=55 // pred_region
          %s942 = smul.u32 %s27, 2
          %s943 = sadd.s32 %s942, %s29
          %s944 = smul.u32 2, %s943
          %p945 = scmp.lt.s32.totalorder %s944, 3
          %s946 = scalar_select %p945, %s944, 3
          %s947 = smul.addr %s946, 8
          %s948 = scalar_lea.vmem %s3, %s947
        $region60: #{tpu_custom_call.1} parent=55 // pred_fallthru
          _
        // Predicated region
        $region61: #{tpu_custom_call.1} parent=55 // pred_check
          %p949 = pneg %p182
        $region62: #{tpu_custom_call.1} parent=55 // pred_check_branch
          %951 = sbr.rel (%p949) target = $region64
        $region63: #{tpu_custom_call.1} parent=55 // pred_region
          %s952 = smul.u32 %s27, 2
          %s953 = sadd.s32 %s952, %s29
          %s954 = smul.u32 2, %s953
          %p955 = scmp.lt.s32.totalorder %s954, 3
          %s956 = scalar_select %p955, %s954, 3
          %s957 = smul.addr %s956, 8
          %s958 = scalar_lea.vmem %s4, %s957
        $region64: #{tpu_custom_call.1} parent=55 // pred_fallthru
          _
      $region56: #{tpu_custom_call.1} parent=5 // pred_fallthru
        _
    $region6: #{tpu_custom_call.1} parent=1 // loop_footer
      %s18 = sadd.s32 1, %s14
    $region7: #{tpu_custom_call.1} parent=1 // loop_footer_branch
      %13 = sbr.rel target = $region3
    $region8: #{tpu_custom_call.1} parent=1 // loop_exit
      _
    %959 = vsyncpa [#allocation7], 1
    %s960 = scalar_lea.sflag [#allocation7], 1
    %961 = vsyncpa %s960, 1

</llo_original>
